<compile_context>
chip_gen: v6e
topology: v6e:2x2x1
jax: 0.10.0
libtpu: 0.0.40
codegen_flags: <defaults>
</compile_context>

<pallas_src>
import math
import functools

import jax
import jax.numpy as jnp
from jax.experimental import pallas as pl
from jax.experimental.pallas import tpu as pltpu


def _round_up(v: int, m: int) -> int:
    return ((v + m - 1) // m) * m


def _sublane_multiple(dtype) -> int:
    # f32 -> 8 sublanes per vreg, bf16 -> 16, int8/fp8 -> 32.
    return max(8, 32 // jnp.dtype(dtype).itemsize)


# --------------------------------------------------------------------------
# Kernels
# --------------------------------------------------------------------------

def _linear_kernel_single_k(x_ref, w_ref, b_ref, o_ref):
    """Single K step: no scratch, no accumulator RMW; bias fused into the store.

    x_ref: (tm, tk)   activation tile (compute dtype)
    w_ref: (tk, tn)   weight tile, already transposed to (in, out)
    b_ref: (1,  tn)   bias tile (f32)
    o_ref: (tm, tn)   output tile
    """
    o_ref[...] = (
        jnp.dot(x_ref[...], w_ref[...], preferred_element_type=jnp.float32)
        + b_ref[...]
    ).astype(o_ref.dtype)


def _linear_kernel_multi_k(x_ref, w_ref, b_ref, o_ref, acc_ref):
    """K is the innermost ("arbitrary") grid axis; acc_ref is resident across it."""
    k = pl.program_id(2)

    part = jnp.dot(x_ref[...], w_ref[...], preferred_element_type=jnp.float32)

    @pl.when(k == 0)
    def _first():
        acc_ref[...] = part            # direct store: no zero-init + add pass

    @pl.when(k > 0)
    def _accumulate():
        acc_ref[...] += part

    @pl.when(k == pl.num_programs(2) - 1)
    def _finalize():
        o_ref[...] = (acc_ref[...] + b_ref[...]).astype(o_ref.dtype)


# --------------------------------------------------------------------------
# One-time parameter preparation (outside the per-call hot path)
# --------------------------------------------------------------------------

def prepare_lowrank_linear_params(
    weight,                      # (out_features, in_features), PyTorch layout
    bias,                        # (out_features,)
    *,
    compute_dtype=jnp.bfloat16,  # default bf16: native MXU rate, half the weight HBM bytes
    tn_pref: int = 256,
    tk_pref: int = 2048,
    ensure_two_n_tiles: bool = True,
):
    """Cast / transpose / pad the parameters exactly once.

    Returns a dict consumed by lowrank_linear_forward. The weight is stored
    transposed as (in, out) so the kernel issues a plain NN matmul on the MXU.
    """
    out_f, in_f = weight.shape
    tn = min(tn_pref, _round_up(out_f, 128))     # lane dim of output -> lane-dense stores
    tk = min(tk_pref, _round_up(in_f, 128))
    Np = _round_up(out_f, tn)
    Kp = _round_up(in_f, tk)

    # v7x has 2 TensorCores: guarantee >=2 parallel output tiles along N (the
    # split that also halves each core's weight DMA) whenever the layer allows.
    if ensure_two_n_tiles and Np // tn == 1 and Np >= 256:
        tn = 128

    w_t = jnp.asarray(weight).T.astype(compute_dtype)        # (in, out)
    w_t = jnp.pad(w_t, ((0, Kp - in_f), (0, Np - out_f)))    # zero K/N pad, done once
    b2d = jnp.pad(jnp.asarray(bias).astype(jnp.float32), (0, Np - out_f)).reshape(1, Np)

    return {
        "wT": w_t,
        "b2d": b2d,
        "out_features": out_f,
        "in_features": in_f,
        "tn": tn,
        "tk": tk,
    }


# --------------------------------------------------------------------------
# Forward
# --------------------------------------------------------------------------

@functools.partial(jax.jit, static_argnames=("out_features", "tn", "tk", "tm_pref"))
def _lowrank_linear_fwd(x, w_t, b2d, *, out_features, tn, tk, tm_pref):
    B, in_f = x.shape
    Kp, Np = w_t.shape
    out_dtype = x.dtype
    cdtype = w_t.dtype

    # tm covers the batch (up to tm_pref) so the weight is streamed from HBM
    # exactly once for typical batches; rounded to the dtype sublane multiple.
    sub = _sublane_multiple(cdtype)
    tm = min(tm_pref, _round_up(B, sub))
    Mp = _round_up(B, tm)

    # Activations: cast per call (they are per-call data anyway); pad is tiny.
    x_c = x if x.dtype == cdtype else x.astype(cdtype)
    if Mp != B or Kp != in_f:
        x_c = jnp.pad(x_c, ((0, Mp - B), (0, Kp - in_f)))

    n_n, n_m, n_k = Np // tn, Mp // tm, Kp // tk
    grid = (n_n, n_m, n_k)          # N outer (megacore split), K innermost reduction

    csize = jnp.dtype(cdtype).itemsize
    cost = pl.CostEstimate(
        flops=2 * B * in_f * out_features,
        transcendentals=0,
        bytes_accessed=int(
            n_n * Mp * Kp * csize              # x re-read once per N tile
            + n_m * Kp * Np * csize            # W re-read once per M tile (1x when tm >= B)
            + Np * 4                           # bias
            + Mp * Np * jnp.dtype(out_dtype).itemsize
        ),
    )

    in_specs = [
        pl.BlockSpec((tm, tk), lambda j, i, k: (i, k)),   # x tile
        pl.BlockSpec((tk, tn), lambda j, i, k: (k, j)),   # W^T tile (in, out): NN dot
        pl.BlockSpec((1, tn), lambda j, i, k: (0, j)),    # bias tile
    ]
    out_spec = pl.BlockSpec((tm, tn), lambda j, i, k: (i, j))

    if n_k == 1:
        kernel = _linear_kernel_single_k
        scratch = []
    else:
        kernel = _linear_kernel_multi_k
        scratch = [pltpu.VMEM((tm, tn), jnp.float32)]

    out_padded = pl.pallas_call(
        kernel,
        out_shape=jax.ShapeDtypeStruct((Mp, Np), out_dtype),
        grid_spec=pltpu.PrefetchScalarGridSpec(
            num_scalar_prefetch=0,
            grid=grid,
            in_specs=in_specs,
            out_specs=out_spec,
            scratch_shapes=scratch,
        ),
        compiler_params=pltpu.CompilerParams(
            # N/M parallel (v7x: 2 TCs split the N tiles); K is the reduction.
            dimension_semantics=("parallel", "parallel", "arbitrary"),
            # Raises v5e's 16 MiB default, stays under v7x's 64 MiB physical VMEM.
            vmem_limit_bytes=48 * 1024 * 1024,
        ),
        cost_estimate=cost,
    )(x_c, w_t, b2d)

    if Mp == B and Np == out_features:
        return out_padded
    return out_padded[:B, :out_features]


def lowrank_linear_forward(x, params, *, tm_pref: int = 512):
    """y = x @ W.T + b using the prepared params from prepare_lowrank_linear_params."""
    assert x.shape[1] == params["in_features"], "in_features mismatch"
    return _lowrank_linear_fwd(
        x,
        params["wT"],
        params["b2d"],
        out_features=params["out_features"],
        tn=params["tn"],
        tk=params["tk"],
        tm_pref=tm_pref,
    )


# --------------------------------------------------------------------------
# Deterministic init matching nn.Linear / reset_parameters()
# --------------------------------------------------------------------------

def init_lowrank_linear_params(key, in_features, out_features):
    """kaiming_uniform_(a=sqrt(5)) -> U(-1/sqrt(fan_in), 1/sqrt(fan_in)); same bound for bias."""
    kw, kb = jax.random.split(key)
    bound = 1.0 / math.sqrt(in_features) if in_features > 0 else 0.0
    weight = jax.random.uniform(
        kw, (out_features, in_features), jnp.float32, minval=-bound, maxval=bound
    )
    bias = jax.random.uniform(
        kb, (out_features,), jnp.float32, minval=-bound, maxval=bound
    )
    return weight, bias


if __name__ == "__main__":
    key = jax.random.PRNGKey(0)
    k_x, k_p, k_x2, k_p2 = jax.random.split(key, 4)

    # --- Test 1: small module-consistent shapes (batch=8, in=32, out=16).
    batch, in_f, out_f = 8, 32, 16
    x = jax.random.normal(k_x, (batch, in_f), dtype=jnp.float32)
    w, b = init_lowrank_linear_params(k_p, in_f, out_f)
    y_ref = x @ w.T + b

    # Default path: bf16 weight storage / compute, f32 accumulate & f32 output.
    params_bf16 = prepare_lowrank_linear_params(w, b)
    y_bf16 = jax.block_until_ready(lowrank_linear_forward(x, params_bf16))
    assert y_bf16.shape == (batch, out_f)
    assert jnp.allclose(y_bf16, y_ref, atol=3e-2, rtol=3e-2), "bf16 path mismatch"

    # f32 compute path, tight tolerance.
    params_f32 = prepare_lowrank_linear_params(w, b, compute_dtype=jnp.float32)
    y_f32 = jax.block_until_ready(lowrank_linear_forward(x, params_f32))
    assert y_f32.shape == (batch, out_f)
    assert jnp.allclose(y_f32, y_ref, atol=1e-5, rtol=1e-5), "f32 path mismatch"

    # --- Test 2: exercises the multi-K accumulator kernel, multiple N tiles,
    # and M/N/K padding (still small).
    B2, in2, out2 = 72, 384, 272
    x2 = jax.random.normal(k_x2, (B2, in2), dtype=jnp.float32)
    w2, b2 = init_lowrank_linear_params(k_p2, in2, out2)
    params2 = prepare_lowrank_linear_params(
        w2, b2, compute_dtype=jnp.float32, tn_pref=128, tk_pref=128
    )
    y2 = jax.block_until_ready(lowrank_linear_forward(x2, params2))
    y2_ref = x2 @ w2.T + b2
    assert y2.shape == (B2, out2)
    assert jnp.allclose(y2, y2_ref, atol=1e-4, rtol=1e-4), "tiled-grid mismatch"

    print("KERNEL_OK")
</pallas_src>

<mosaic_0001>
module attributes {stable_mosaic.version = 11 : i64} {
  func.func @_linear_kernel_single_k(%arg0: i32, %arg1: i32, %arg2: i32, %arg3: memref<16x128xbf16, #tpu.memory_space<vmem>>, %arg4: memref<128x128xbf16, #tpu.memory_space<vmem>>, %arg5: memref<1x128xf32, #tpu.memory_space<vmem>>, %arg6: memref<16x128xf32, #tpu.memory_space<vmem>>) attributes {dimension_semantics = [#tpu.dimension_semantics<parallel>, #tpu.dimension_semantics<parallel>, #tpu.dimension_semantics<arbitrary>], iteration_bounds = array<i64: 1, 1, 1>, scalar_prefetch = 0 : i64, scratch_operands = 0 : i64, tpu.core_type = #tpu.core_type<tc>, window_params = [{transform_indices = @transform_0, window_bounds = array<i64: 16, 128>}, {transform_indices = @transform_1, window_bounds = array<i64: 128, 128>}, {transform_indices = @transform_2, window_bounds = array<i64: 1, 128>}, {transform_indices = @transform_3, window_bounds = array<i64: 16, 128>}]} {
    %c0 = arith.constant 0 : index
    %c0_0 = arith.constant 0 : index
    %0 = vector.load %arg3[%c0, %c0_0] : memref<16x128xbf16, #tpu.memory_space<vmem>>, vector<16x128xbf16>
    %c0_1 = arith.constant 0 : index
    %c0_2 = arith.constant 0 : index
    %1 = vector.load %arg4[%c0_1, %c0_2] : memref<128x128xbf16, #tpu.memory_space<vmem>>, vector<128x128xbf16>
    %cst = arith.constant dense<0.000000e+00> : vector<16x128xf32>
    %2 = tpu.matmul %0, %1, %cst {dimension_numbers = #tpu.dot_dimension_numbers<[1], [0], [0], [1], [0, 0, 1, 1], [], []>} : vector<16x128xbf16>, vector<128x128xbf16>, vector<16x128xf32> -> vector<16x128xf32>
    %c0_3 = arith.constant 0 : index
    %c0_4 = arith.constant 0 : index
    %3 = vector.load %arg5[%c0_3, %c0_4] : memref<1x128xf32, #tpu.memory_space<vmem>>, vector<1x128xf32>
    %4 = vector.broadcast %3 : vector<1x128xf32> to vector<16x128xf32>
    %5 = arith.addf %2, %4 : vector<16x128xf32>
    %c0_5 = arith.constant 0 : index
    %c0_6 = arith.constant 0 : index
    %6 = vector.load %arg6[%c0_5, %c0_6] : memref<16x128xf32, #tpu.memory_space<vmem>>, vector<16x128xf32>
    tpu.vector_store %arg6[%c0_5, %c0_6], %5 {strides = array<i32>} : memref<16x128xf32, #tpu.memory_space<vmem>>, vector<16x128xf32>,
    return
  }
  func.func @transform_0(%arg0: i32, %arg1: i32, %arg2: i32) -> (i32, i32) {
    %c0_i32 = arith.constant 0 : i32
    return %arg1, %arg2 : i32, i32
  }
  func.func @transform_1(%arg0: i32, %arg1: i32, %arg2: i32) -> (i32, i32) {
    %c0_i32 = arith.constant 0 : i32
    return %arg2, %arg0 : i32, i32
  }
  func.func @transform_2(%arg0: i32, %arg1: i32, %arg2: i32) -> (i32, i32) {
    %c0_i32 = arith.constant 0 : i32
    %c0_i32_0 = arith.constant 0 : i32
    return %c0_i32, %arg0 : i32, i32
  }
  func.func @transform_3(%arg0: i32, %arg1: i32, %arg2: i32) -> (i32, i32) {
    %c0_i32 = arith.constant 0 : i32
    return %arg1, %arg0 : i32, i32
  }
}

</mosaic_0001>

<llo_original>
// kernel: _lowrank_linear_fwd.1
$region0: #{_lowrank_linear_fwd.1}
  #allocation0 [shape = 'u32[]', space=smem, size = 0x4, offset = 0x4, fixed_abs, tag = 'smem constant byte address 0x4 - core index']
  #allocation1 [shape = 'u32[144,128]{1,0:T(1,128)}', space=vmem, size = 0x12000, scoped, tag = 'internal scratch']
  %s0 = inlined_call_operand.vmem [shape: bf16[16,128], index: 0, kind: input, shape index: {}]
  %s1 = inlined_call_operand.hbm [shape: bf16[128,128], index: 1, kind: input, shape index: {}]
  %s2 = inlined_call_operand.vmem [shape: f32[1,128], index: 2, kind: input, shape index: {}]
  %s3 = inlined_call_operand.vmem [shape: f32[16,128], index: 3, kind: output, shape index: {}]
  %s4 = sld [smem:[#allocation0]]
  $region26: #{_lowrank_linear_fwd.1} parent=0
    _
  %s6 = ssub.s32 1, %s4
  %s7 = scalar_select 0, %s6, %s4
  $region1: #{_lowrank_linear_fwd.1} parent=0
    #allocation2 [shape = 'u8[32768]{0}', space=vmem, size = 0x8000, scoped, tag = 'input window, operand 1, single buffered']
    #allocation3 [shape = 's32[1]{0}', space=sflag, size = 0x4, scoped, tag = 'scoped memory for _lowrank_linear_fwd.1']
    %8 = vsyncpa [#allocation3], 0
    // Predicated region
    $region2: #{_lowrank_linear_fwd.1} parent=1 // pred_check
      _
    $region3: #{_lowrank_linear_fwd.1} parent=1 // pred_check_branch
      %10 = sbr.rel (0) target = $region5
    $region4: #{_lowrank_linear_fwd.1} parent=1 // pred_region
      _
    $region5: #{_lowrank_linear_fwd.1} parent=1 // pred_fallthru
      _
    // Predicated region
    $region6: #{_lowrank_linear_fwd.1} parent=1 // pred_check
      _
    $region7: #{_lowrank_linear_fwd.1} parent=1 // pred_check_branch
      %12 = sbr.rel (0) target = $region9
    $region8: #{_lowrank_linear_fwd.1} parent=1 // pred_region
      %s14 = ssub.s32 1024, 1024
      %15 = vsyncadd [#allocation3], %s14
      %s16 = sshll.u32 [#allocation2], 4
      %s17 = int_to_ptr.vmem [resolvable:$true] %s16
      %22 = dma.hbm_to_vmem [thread:$0]  %s1, 1024, %s17, [#allocation3], 64, 64, 4
    $region9: #{_lowrank_linear_fwd.1} parent=1 // pred_fallthru
      _
    // Predicated region
    $region10: #{_lowrank_linear_fwd.1} parent=1 // pred_check
      _
    $region11: #{_lowrank_linear_fwd.1} parent=1 // pred_check_branch
      %24 = sbr.rel (0) target = $region13
    $region12: #{_lowrank_linear_fwd.1} parent=1 // pred_region
      _
    $region13: #{_lowrank_linear_fwd.1} parent=1 // pred_fallthru
      _
    // Predicated region
    $region14: #{_lowrank_linear_fwd.1} parent=1 // pred_check
      _
    $region15: #{_lowrank_linear_fwd.1} parent=1 // pred_check_branch
      %26 = sbr.rel (0) target = $region17
    $region16: #{_lowrank_linear_fwd.1} parent=1 // pred_region
      %27 = dma.done [#allocation3], 1024
    $region17: #{_lowrank_linear_fwd.1} parent=1 // pred_fallthru
      _
    %v29 = vld [vmem:[%s0] sm:$0xf]
    %v30 = vld [vmem:[%s0 + $0x4] sm:$0xf]
    %v31 = vld [vmem:[#allocation2] sm:$0xf]
    %v32 = vld [vmem:[#allocation2 + $0x4] sm:$0xf]
    %v33 = vld [vmem:[#allocation2 + $0x8] sm:$0xf]
    %v34 = vld [vmem:[#allocation2 + $0xc] sm:$0xf]
    %v35 = vld [vmem:[#allocation2 + $0x10] sm:$0xf]
    %v36 = vld [vmem:[#allocation2 + $0x14] sm:$0xf]
    %v37 = vld [vmem:[#allocation2 + $0x18] sm:$0xf]
    %v38 = vld [vmem:[#allocation2 + $0x1c] sm:$0xf]
    %v39 = vld [vmem:[#allocation2 + $0x20] sm:$0xf]
    %v40 = vld [vmem:[#allocation2 + $0x24] sm:$0xf]
    %v41 = vld [vmem:[#allocation2 + $0x28] sm:$0xf]
    %v42 = vld [vmem:[#allocation2 + $0x2c] sm:$0xf]
    %v43 = vld [vmem:[#allocation2 + $0x30] sm:$0xf]
    %v44 = vld [vmem:[#allocation2 + $0x34] sm:$0xf]
    %v45 = vld [vmem:[#allocation2 + $0x38] sm:$0xf]
    %v46 = vld [vmem:[#allocation2 + $0x3c] sm:$0xf]
    %v47 = vld [vmem:[%s2] sm:$0x1]
    %v49 = vlaneseq
    %v50 = vshrl.u32 %v49, 7
    %v51 = vsub.s32 0, %v50
    %v52 = vrot.slane %v47, %v51
    %v56 = vunpack.c.l.b16 %v29
    %v57 = vunpack.c.l.b16 %v30
    %v58 = vpack.c.b16 %v57, %v56
    %v76 = vunpack.c.l.b16 %v31
    %v77 = vunpack.c.l.b16 %v32
    %v78 = vunpack.c.l.b16 %v33
    %v79 = vunpack.c.l.b16 %v34
    %v80 = vunpack.c.l.b16 %v35
    %v81 = vunpack.c.l.b16 %v36
    %v82 = vunpack.c.l.b16 %v37
    %v83 = vunpack.c.l.b16 %v38
    %v84 = vunpack.c.l.b16 %v39
    %v85 = vunpack.c.l.b16 %v40
    %v86 = vunpack.c.l.b16 %v41
    %v87 = vunpack.c.l.b16 %v42
    %v88 = vunpack.c.l.b16 %v43
    %v89 = vunpack.c.l.b16 %v44
    %v90 = vunpack.c.l.b16 %v45
    %v91 = vunpack.c.l.b16 %v46
    %v92 = vpack.c.b16 %v77, %v76
    %v93 = vpack.c.b16 %v79, %v78
    %v94 = vpack.c.b16 %v81, %v80
    %v95 = vpack.c.b16 %v83, %v82
    %v96 = vpack.c.b16 %v85, %v84
    %v97 = vpack.c.b16 %v87, %v86
    %v98 = vpack.c.b16 %v89, %v88
    %v99 = vpack.c.b16 %v91, %v90
    %108 = vmatprep.subr.bf16.mxu0 0
    %109 = vmatpush1.bf16.msra.mxu0 %v99
    %110 = vmatprep.subr.bf16.mxu0 0
    %111 = vmatpush1.bf16.msra.mxu0 %v98
    %112 = vmatprep.subr.bf16.mxu0 0
    %113 = vmatpush1.bf16.msra.mxu0 %v97
    %114 = vmatprep.subr.bf16.mxu0 0
    %115 = vmatpush1.bf16.msra.mxu0 %v96
    %116 = vmatprep.subr.bf16.mxu0 0
    %117 = vmatpush1.bf16.msra.mxu0 %v95
    %118 = vmatprep.subr.bf16.mxu0 0
    %119 = vmatpush1.bf16.msra.mxu0 %v94
    %120 = vmatprep.subr.bf16.mxu0 0
    %121 = vmatpush1.bf16.msra.mxu0 %v93
    %122 = vmatprep.subr.bf16.mxu0 0
    %123 = vmatpush1.bf16.msra.mxu0 %v92
    %124 = vmatprep.subr.bf16.mxu0 0
    %125 = vmatpush2.bf16.msra.mxu0 0
    %126 = vmatprep.subr.bf16.mxu0 0
    %127 = vmatpush2.bf16.msra.mxu0 0
    %128 = vmatprep.subr.bf16.mxu0 0
    %129 = vmatpush2.bf16.msra.mxu0 0
    %130 = vmatprep.subr.bf16.mxu0 0
    %131 = vmatpush2.bf16.msra.mxu0 0
    %132 = vmatprep.subr.bf16.mxu0 0
    %133 = vmatpush2.bf16.msra.mxu0 0
    %134 = vmatprep.subr.bf16.mxu0 0
    %135 = vmatpush2.bf16.msra.mxu0 0
    %136 = vmatprep.subr.bf16.mxu0 0
    %137 = vmatpush2.bf16.msra.mxu0 0
    %138 = vmatprep.subr.bf16.mxu0 0
    %139 = vmatpush2.bf16.msra.mxu0 0
    %140 = vmatprep.mubr.bf16.mxu0 0
    %141 = vmatmul.mubr.bf16.gmra.mxu0 %v58
    %v142 = vpop.f32.mrf.mxu0
    %v143 = vadd.f32 %v52, %v142
    %v144 = vpop.f32.mrf.mxu0
    %v145 = vpop.f32.mrf.mxu0
    %v146 = vadd.f32 %v52, %v145
    %v147 = vpop.f32.mrf.mxu0
    %148 = vdwg.mxu0
    %149 = vst [vmem:[%s3] sm:$0xff] %v143
    %150 = vst [vmem:[%s3 + $0x8] sm:$0xff] %v146
    // Predicated region
    $region18: #{_lowrank_linear_fwd.1} parent=1 // pred_check
      _
    $region19: #{_lowrank_linear_fwd.1} parent=1 // pred_check_branch
      %152 = sbr.rel (0) target = $region21
    $region20: #{_lowrank_linear_fwd.1} parent=1 // pred_region
      _
    $region21: #{_lowrank_linear_fwd.1} parent=1 // pred_fallthru
      _
    // Predicated region
    $region22: #{_lowrank_linear_fwd.1} parent=1 // pred_check
      _
    $region23: #{_lowrank_linear_fwd.1} parent=1 // pred_check_branch
      %154 = sbr.rel (0) target = $region25
    $region24: #{_lowrank_linear_fwd.1} parent=1 // pred_region
      _
    $region25: #{_lowrank_linear_fwd.1} parent=1 // pred_fallthru
      _
    %155 = vsyncpa [#allocation3], 1

</llo_original>
